<compile_context>
chip_gen: v7x
topology: tpu7x:2x2x1
jax: 0.10.0
libtpu: 0.0.40
codegen_flags: <defaults>
</compile_context>

<pallas_src>
import jax
import jax.numpy as jnp
from jax.experimental import pallas as pl
from jax.experimental.pallas import tpu as pltpu


def critic_kernel(x_ref, w1_ref, b1_ref, w2_ref, b2_ref, w3_ref, b3_ref, o_ref):
    # fc1: bf16 x @ bf16 W1 on the MXU, f32 accumulate; bias + ReLU in f32 (VPU).
    h1 = jnp.dot(x_ref[...], w1_ref[...], preferred_element_type=jnp.float32)
    h1 = jnp.maximum(h1 + b1_ref[...], 0.0)
    # fc2: cast the f32 activations back to bf16 for an MXU-native pass.
    h2 = jnp.dot(h1.astype(jnp.bfloat16), w2_ref[...],
                 preferred_element_type=jnp.float32)
    h2 = jnp.maximum(h2 + b2_ref[...], 0.0)
    # fc3 (64 -> 1): VPU multiply + cross-lane (XLU) reduction; skips an
    # almost-empty N=1 MXU pass.  w3_ref is a (1, 64) f32 row broadcast over
    # the batch rows; b3_ref is (1, 1).
    out = jnp.sum(h2 * w3_ref[...], axis=-1, keepdims=True) + b3_ref[...]
    o_ref[...] = out.astype(o_ref.dtype)


def _choose_tile_b(B, D):
    """Pick the batch tile (the only free axis: K in {obs_dim, 64} and
    N in {64, 1} are fixed by the model).

    Priorities:
      * multiple of 256 for large B (fills the MXU M dimension on v5e's
        4x128^2 and v6e/v7x's 2x256^2 arrays), else a multiple of 16
        (bf16 packs 16 rows per sublane tile),
      * >= 2 grid steps whenever B allows, so ("parallel",) semantics can
        shard the batch across v7x's two TensorCores (no-op on v5e/v6e),
      * <= ~4 MiB of bf16 x rows per pipeline buffer, so the double-buffered
        pipeline fits v5e's 16 MiB scoped-VMEM default with ample headroom
        on v7x's 64 MiB physical VMEM.
    """
    if B < 32 or B % 16 != 0:
        # Tiny / awkward batches: one full-batch tile (always legal).
        # TODO(synk): very large batches not a multiple of 16 should be padded
        # by the caller; a single tile could exceed the VMEM budget.
        return B
    row_bytes = 2 * D + 4                       # bf16 x row + f32 out row
    max_rows = max(16, (4 << 20) // row_bytes)  # ~4 MiB per pipeline buffer
    cap = min(B // 2, max_rows)                 # >= 2 grid steps
    for step in (256, 16):
        t = (cap // step) * step
        while t >= step:
            if B % t == 0:
                return t
            t -= step
    return B


def critic_forward(x, params, *, tile_b=None):
    """x: [B, D_obs] float32 (or bf16). params: dict of w1,b1,w2,b2,w3,b3.

    w1: (D, 64) bf16, w2: (64, 64) bf16, b1/b2: (1, 64) f32,
    w3: (1, 64) f32 row (transposed 64->1 weight), b3: (1, 1) f32.
    Returns [B, 1] f32 (the value estimate).
    """
    B, D = x.shape
    H1 = params["w1"].shape[1]
    H2 = params["w2"].shape[1]

    if tile_b is None:
        tile_b = _choose_tile_b(B, D)
    assert B % tile_b == 0, "tile_b must divide B"
    # Sublane rule: the (tile_b, D) bf16 block needs tile_b to be a multiple
    # of 16 (bf16 packs 16 rows per sublane tile) unless it spans the full
    # batch dimension.
    assert tile_b == B or tile_b % 16 == 0, "tile_b must be a multiple of 16"

    grid = (B // tile_b,)
    x_bf16 = x.astype(jnp.bfloat16)  # halves HBM read traffic; MXU-native

    # Advisory cost hint for XLA's scheduler around this small kernel.
    flops = 2 * B * (D * H1 + H1 * H2 + H2)
    bytes_accessed = (
        B * D * 2 + B * 4                       # bf16 x in, f32 value out
        + params["w1"].size * 2 + params["w2"].size * 2
        + (params["b1"].size + params["b2"].size
           + params["w3"].size + params["b3"].size) * 4
    )

    in_specs = [
        pl.BlockSpec((tile_b, D), lambda i: (i, 0)),  # x: batch-tiled
        pl.BlockSpec((D, H1), lambda i: (0, 0)),      # weights/biases: resident
        pl.BlockSpec((1, H1), lambda i: (0, 0)),
        pl.BlockSpec((H1, H2), lambda i: (0, 0)),
        pl.BlockSpec((1, H2), lambda i: (0, 0)),
        pl.BlockSpec((1, H2), lambda i: (0, 0)),      # w3 row
        pl.BlockSpec((1, 1), lambda i: (0, 0)),       # b3
    ]
    out_spec = pl.BlockSpec((tile_b, 1), lambda i: (i, 0))

    return pl.pallas_call(
        critic_kernel,
        out_shape=jax.ShapeDtypeStruct((B, 1), jnp.float32),
        grid_spec=pltpu.PrefetchScalarGridSpec(
            num_scalar_prefetch=0,
            grid=grid,
            in_specs=in_specs,
            out_specs=out_spec,
        ),
        compiler_params=pltpu.CompilerParams(
            dimension_semantics=("parallel",),
        ),
        cost_estimate=pl.CostEstimate(
            flops=flops, transcendentals=0, bytes_accessed=bytes_accessed),
    )(x_bf16, params["w1"], params["b1"], params["w2"], params["b2"],
      params["w3"], params["b3"])


def init_params(key, obs_dim, h1=64, h2=64):
    """Deterministic init mimicking PyTorch nn.Linear default
    (uniform +-1/sqrt(fan_in)).  Matmul weights are stored bf16 ([in, out]);
    biases and the final 64->1 weight (stored as a (1, 64) row for the VPU
    path) stay f32."""
    ks = jax.random.split(key, 6)

    def linear(kw, kb, fan_in, fan_out):
        bound = 1.0 / jnp.sqrt(fan_in)
        w = jax.random.uniform(kw, (fan_in, fan_out), jnp.float32, -bound, bound)
        b = jax.random.uniform(kb, (1, fan_out), jnp.float32, -bound, bound)
        return w, b

    w1, b1 = linear(ks[0], ks[1], obs_dim, h1)
    w2, b2 = linear(ks[2], ks[3], h1, h2)
    w3, b3 = linear(ks[4], ks[5], h2, 1)
    return {
        "w1": w1.astype(jnp.bfloat16), "b1": b1,
        "w2": w2.astype(jnp.bfloat16), "b2": b2,
        "w3": w3.reshape(1, h2),                      # (1, 64) f32 row
        "b3": b3.reshape(1, 1),                       # (1, 1) f32
    }


if __name__ == "__main__":
    key = jax.random.PRNGKey(0)
    k_x, k_p = jax.random.split(key)

    # obs_dim stands in for observation_space['observation'].shape[0]
    B, OBS_DIM = 8, 32
    x = jax.random.normal(k_x, (B, OBS_DIM), dtype=jnp.float32)
    params = init_params(k_p, OBS_DIM)

    out = critic_forward(x, params)
    out = jax.block_until_ready(out)

    # Pure-JAX reference with identical quantization points (bf16 inputs to
    # both matmuls, f32 accumulate, f32 bias/ReLU, VPU-style final layer).
    xb = x.astype(jnp.bfloat16).astype(jnp.float32)
    w1f = params["w1"].astype(jnp.float32)
    w2f = params["w2"].astype(jnp.float32)
    h1 = jnp.maximum(xb @ w1f + params["b1"], 0.0)
    h1b = h1.astype(jnp.bfloat16).astype(jnp.float32)
    h2 = jnp.maximum(h1b @ w2f + params["b2"], 0.0)
    ref = jnp.sum(h2 * params["w3"], axis=-1, keepdims=True) + params["b3"]

    assert out.shape == (B, 1)
    assert jnp.allclose(out, ref, atol=1e-2, rtol=1e-2)

    print("KERNEL_OK")
</pallas_src>

<mosaic_0001>
module attributes {stable_mosaic.version = 11 : i64} {
  func.func @critic_kernel(%arg0: i32, %arg1: memref<8x32xbf16, #tpu.memory_space<vmem>>, %arg2: memref<32x64xbf16, #tpu.memory_space<vmem>>, %arg3: memref<1x64xf32, #tpu.memory_space<vmem>>, %arg4: memref<64x64xbf16, #tpu.memory_space<vmem>>, %arg5: memref<1x64xf32, #tpu.memory_space<vmem>>, %arg6: memref<1x64xf32, #tpu.memory_space<vmem>>, %arg7: memref<1x1xf32, #tpu.memory_space<vmem>>, %arg8: memref<8x1xf32, #tpu.memory_space<vmem>>) attributes {dimension_semantics = [#tpu.dimension_semantics<parallel>], iteration_bounds = array<i64: 1>, scalar_prefetch = 0 : i64, scratch_operands = 0 : i64, tpu.core_type = #tpu.core_type<tc>, window_params = [{transform_indices = @transform_0, window_bounds = array<i64: 8, 32>}, {pipeline_mode = #tpu.pipeline_mode<synchronous>, transform_indices = @transform_1, window_bounds = array<i64: 32, 64>}, {pipeline_mode = #tpu.pipeline_mode<synchronous>, transform_indices = @transform_2, window_bounds = array<i64: 1, 64>}, {pipeline_mode = #tpu.pipeline_mode<synchronous>, transform_indices = @transform_3, window_bounds = array<i64: 64, 64>}, {pipeline_mode = #tpu.pipeline_mode<synchronous>, transform_indices = @transform_4, window_bounds = array<i64: 1, 64>}, {pipeline_mode = #tpu.pipeline_mode<synchronous>, transform_indices = @transform_5, window_bounds = array<i64: 1, 64>}, {pipeline_mode = #tpu.pipeline_mode<synchronous>, transform_indices = @transform_6, window_bounds = array<i64: 1, 1>}, {transform_indices = @transform_7, window_bounds = array<i64: 8, 1>}]} {
    %c0 = arith.constant 0 : index
    %c0_0 = arith.constant 0 : index
    %0 = vector.load %arg1[%c0, %c0_0] : memref<8x32xbf16, #tpu.memory_space<vmem>>, vector<8x32xbf16>
    %c0_1 = arith.constant 0 : index
    %c0_2 = arith.constant 0 : index
    %1 = vector.load %arg2[%c0_1, %c0_2] : memref<32x64xbf16, #tpu.memory_space<vmem>>, vector<32x64xbf16>
    %cst = arith.constant dense<0.000000e+00> : vector<8x64xf32>
    %2 = tpu.matmul %0, %1, %cst {dimension_numbers = #tpu.dot_dimension_numbers<[1], [0], [0], [1], [0, 0, 1, 1], [], []>} : vector<8x32xbf16>, vector<32x64xbf16>, vector<8x64xf32> -> vector<8x64xf32>
    %c0_3 = arith.constant 0 : index
    %c0_4 = arith.constant 0 : index
    %3 = vector.load %arg3[%c0_3, %c0_4] : memref<1x64xf32, #tpu.memory_space<vmem>>, vector<1x64xf32>
    %4 = vector.broadcast %3 : vector<1x64xf32> to vector<8x64xf32>
    %5 = arith.addf %2, %4 : vector<8x64xf32>
    %cst_5 = arith.constant 0.000000e+00 : f32
    %6 = vector.broadcast %cst_5 : f32 to vector<8x64xf32>
    %7 = arith.maximumf %5, %6 : vector<8x64xf32>
    %8 = arith.truncf %7 : vector<8x64xf32> to vector<8x64xbf16>
    %c0_6 = arith.constant 0 : index
    %c0_7 = arith.constant 0 : index
    %9 = vector.load %arg4[%c0_6, %c0_7] : memref<64x64xbf16, #tpu.memory_space<vmem>>, vector<64x64xbf16>
    %cst_8 = arith.constant dense<0.000000e+00> : vector<8x64xf32>
    %10 = tpu.matmul %8, %9, %cst_8 {dimension_numbers = #tpu.dot_dimension_numbers<[1], [0], [0], [1], [0, 0, 1, 1], [], []>} : vector<8x64xbf16>, vector<64x64xbf16>, vector<8x64xf32> -> vector<8x64xf32>
    %c0_9 = arith.constant 0 : index
    %c0_10 = arith.constant 0 : index
    %11 = vector.load %arg5[%c0_9, %c0_10] : memref<1x64xf32, #tpu.memory_space<vmem>>, vector<1x64xf32>
    %12 = vector.broadcast %11 : vector<1x64xf32> to vector<8x64xf32>
    %13 = arith.addf %10, %12 : vector<8x64xf32>
    %cst_11 = arith.constant 0.000000e+00 : f32
    %14 = vector.broadcast %cst_11 : f32 to vector<8x64xf32>
    %15 = arith.maximumf %13, %14 : vector<8x64xf32>
    %c0_12 = arith.constant 0 : index
    %c0_13 = arith.constant 0 : index
    %16 = vector.load %arg6[%c0_12, %c0_13] : memref<1x64xf32, #tpu.memory_space<vmem>>, vector<1x64xf32>
    %17 = vector.broadcast %16 : vector<1x64xf32> to vector<8x64xf32>
    %18 = arith.mulf %15, %17 : vector<8x64xf32>
    %cst_14 = arith.constant dense<0.000000e+00> : vector<8xf32>
    %19 = vector.multi_reduction <add>, %18, %cst_14 [1] : vector<8x64xf32> to vector<8xf32>
    %20 = vector.shape_cast %19 : vector<8xf32> to vector<8x1xf32>
    %c0_15 = arith.constant 0 : index
    %c0_16 = arith.constant 0 : index
    %21 = vector.load %arg7[%c0_15, %c0_16] : memref<1x1xf32, #tpu.memory_space<vmem>>, vector<1x1xf32>
    %22 = vector.broadcast %21 : vector<1x1xf32> to vector<8x1xf32>
    %23 = arith.addf %20, %22 : vector<8x1xf32>
    %c0_17 = arith.constant 0 : index
    %c0_18 = arith.constant 0 : index
    %24 = vector.load %arg8[%c0_17, %c0_18] : memref<8x1xf32, #tpu.memory_space<vmem>>, vector<8x1xf32>
    tpu.vector_store %arg8[%c0_17, %c0_18], %23 {strides = array<i32>} : memref<8x1xf32, #tpu.memory_space<vmem>>, vector<8x1xf32>,
    return
  }
  func.func @transform_0(%arg0: i32) -> (i32, i32) {
    %c0_i32 = arith.constant 0 : i32
    %c0_i32_0 = arith.constant 0 : i32
    return %arg0, %c0_i32 : i32, i32
  }
  func.func @transform_1(%arg0: i32) -> (i32, i32) {
    %c0_i32 = arith.constant 0 : i32
    %c0_i32_0 = arith.constant 0 : i32
    %c0_i32_1 = arith.constant 0 : i32
    return %c0_i32, %c0_i32_0 : i32, i32
  }
  func.func @transform_2(%arg0: i32) -> (i32, i32) {
    %c0_i32 = arith.constant 0 : i32
    %c0_i32_0 = arith.constant 0 : i32
    %c0_i32_1 = arith.constant 0 : i32
    return %c0_i32, %c0_i32_0 : i32, i32
  }
  func.func @transform_3(%arg0: i32) -> (i32, i32) {
    %c0_i32 = arith.constant 0 : i32
    %c0_i32_0 = arith.constant 0 : i32
    %c0_i32_1 = arith.constant 0 : i32
    return %c0_i32, %c0_i32_0 : i32, i32
  }
  func.func @transform_4(%arg0: i32) -> (i32, i32) {
    %c0_i32 = arith.constant 0 : i32
    %c0_i32_0 = arith.constant 0 : i32
    %c0_i32_1 = arith.constant 0 : i32
    return %c0_i32, %c0_i32_0 : i32, i32
  }
  func.func @transform_5(%arg0: i32) -> (i32, i32) {
    %c0_i32 = arith.constant 0 : i32
    %c0_i32_0 = arith.constant 0 : i32
    %c0_i32_1 = arith.constant 0 : i32
    return %c0_i32, %c0_i32_0 : i32, i32
  }
  func.func @transform_6(%arg0: i32) -> (i32, i32) {
    %c0_i32 = arith.constant 0 : i32
    %c0_i32_0 = arith.constant 0 : i32
    %c0_i32_1 = arith.constant 0 : i32
    return %c0_i32, %c0_i32_0 : i32, i32
  }
  func.func @transform_7(%arg0: i32) -> (i32, i32) {
    %c0_i32 = arith.constant 0 : i32
    %c0_i32_0 = arith.constant 0 : i32
    return %arg0, %c0_i32 : i32, i32
  }
}

</mosaic_0001>

<llo_original>
// kernel: tpu_custom_call.1
$region0: #{tpu_custom_call.1}
  #allocation0 [shape = 'u32[]', space=smem, size = 0x4, offset = 0x4, fixed_abs, tag = 'smem constant byte address 0x4 - core index']
  #allocation1 [shape = 'u32[144,128]{1,0:T(1,128)}', space=vmem, size = 0x12000, scoped, tag = 'internal scratch']
  #allocation2 [shape = 'f32[1,1]{1,0:T(1,128)S(1)}', space=vmem, size = 0x200, scoped, tag = 'scoped memory for tpu_custom_call.1']
  %s0 = inlined_call_operand.hbm [shape: bf16[8,32], index: 0, kind: input, shape index: {}]
  %s1 = inlined_call_operand.hbm [shape: bf16[32,64], index: 1, kind: input, shape index: {}]
  %s2 = inlined_call_operand.vmem [shape: f32[1,64], index: 2, kind: input, shape index: {}]
  %s3 = inlined_call_operand.hbm [shape: bf16[64,64], index: 3, kind: input, shape index: {}]
  %s4 = inlined_call_operand.vmem [shape: f32[1,64], index: 4, kind: input, shape index: {}]
  %s5 = inlined_call_operand.vmem [shape: f32[1,64], index: 5, kind: input, shape index: {}]
  %s6 = inlined_call_operand.<no memory space> [shape: f32[1,1], index: 6, kind: input, shape index: {}]
  %s7 = inlined_call_operand.vmem [shape: f32[8,1], index: 7, kind: output, shape index: {}]
  %s8 = sld [smem:[#allocation0]]
  $region50: #{tpu_custom_call.1} parent=0
    _
  %s10 = ssub.s32 1, %s8
  %s11 = scalar_select 0, %s10, %s8
  %v12 = vstv %s6
  %13 = vst [vmem:[#allocation2] sm:$0x1] %v12
  $region1: #{tpu_custom_call.1} parent=0
    #allocation3 [shape = 'u8[2048]{0}', space=vmem, size = 0x800, scoped, tag = 'input window, operand 0, single buffered']
    #allocation4 [shape = 's32[1]{0}', space=sflag, size = 0x4, scoped, tag = 'scoped memory for tpu_custom_call.1']
    #allocation5 [shape = 'u8[8192]{0}', space=vmem, size = 0x2000, scoped, tag = 'input window, operand 1, single buffered']
    #allocation6 [shape = 's32[1]{0}', space=sflag, size = 0x4, scoped, tag = 'scoped memory for tpu_custom_call.1']
    #allocation7 [shape = 'u8[16384]{0}', space=vmem, size = 0x4000, scoped, tag = 'input window, operand 3, single buffered']
    %14 = vsyncpa [#allocation4], 0
    %15 = vsyncpa [#allocation6], 0
    // Predicated region
    $region2: #{tpu_custom_call.1} parent=1 // pred_check
      _
    $region3: #{tpu_custom_call.1} parent=1 // pred_check_branch
      %17 = sbr.rel (0) target = $region5
    $region4: #{tpu_custom_call.1} parent=1 // pred_region
      %s19 = ssub.s32 64, 64
      %20 = vsyncadd [#allocation4], %s19
      %s22 = sshll.u32 [#allocation3], 4
      %s23 = int_to_ptr.vmem [resolvable:$true] %s22
      %25 = dma.hbm_to_vmem [thread:$0]  %s0, 64, %s23, [#allocation4]
    $region5: #{tpu_custom_call.1} parent=1 // pred_fallthru
      _
    // Predicated region
    $region6: #{tpu_custom_call.1} parent=1 // pred_check
      _
    $region7: #{tpu_custom_call.1} parent=1 // pred_check_branch
      %27 = sbr.rel (0) target = $region9
    $region8: #{tpu_custom_call.1} parent=1 // pred_region
      %s29 = ssub.s32 256, 256
      %30 = vsyncadd [#allocation6], %s29
      %s31 = sshll.u32 [#allocation5], 4
      %s32 = int_to_ptr.vmem [resolvable:$true] %s31
      %37 = dma.hbm_to_vmem [thread:$0]  %s1, 256, %s32, [#allocation6], 64, 64, 4
    $region9: #{tpu_custom_call.1} parent=1 // pred_fallthru
      _
    // Predicated region
    $region10: #{tpu_custom_call.1} parent=1 // pred_check
      _
    $region11: #{tpu_custom_call.1} parent=1 // pred_check_branch
      %39 = sbr.rel (0) target = $region13
    $region12: #{tpu_custom_call.1} parent=1 // pred_region
      _
    $region13: #{tpu_custom_call.1} parent=1 // pred_fallthru
      _
    // Predicated region
    $region14: #{tpu_custom_call.1} parent=1 // pred_check
      _
    $region15: #{tpu_custom_call.1} parent=1 // pred_check_branch
      %41 = sbr.rel (0) target = $region17
    $region16: #{tpu_custom_call.1} parent=1 // pred_region
      %s43 = ssub.s32 512, 512
      %44 = vsyncadd [#allocation6], %s43
      %s45 = sshll.u32 [#allocation7], 4
      %s46 = int_to_ptr.vmem [resolvable:$true] %s45
      %51 = dma.hbm_to_vmem [thread:$0]  %s3, 512, %s46, [#allocation6], 64, 64, 4
    $region17: #{tpu_custom_call.1} parent=1 // pred_fallthru
      _
    // Predicated region
    $region18: #{tpu_custom_call.1} parent=1 // pred_check
      _
    $region19: #{tpu_custom_call.1} parent=1 // pred_check_branch
      %53 = sbr.rel (0) target = $region21
    $region20: #{tpu_custom_call.1} parent=1 // pred_region
      _
    $region21: #{tpu_custom_call.1} parent=1 // pred_fallthru
      _
    // Predicated region
    $region22: #{tpu_custom_call.1} parent=1 // pred_check
      _
    $region23: #{tpu_custom_call.1} parent=1 // pred_check_branch
      %55 = sbr.rel (0) target = $region25
    $region24: #{tpu_custom_call.1} parent=1 // pred_region
      _
    $region25: #{tpu_custom_call.1} parent=1 // pred_fallthru
      _
    // Predicated region
    $region26: #{tpu_custom_call.1} parent=1 // pred_check
      _
    $region27: #{tpu_custom_call.1} parent=1 // pred_check_branch
      %57 = sbr.rel (0) target = $region29
    $region28: #{tpu_custom_call.1} parent=1 // pred_region
      _
    $region29: #{tpu_custom_call.1} parent=1 // pred_fallthru
      _
    // Predicated region
    $region30: #{tpu_custom_call.1} parent=1 // pred_check
      _
    $region31: #{tpu_custom_call.1} parent=1 // pred_check_branch
      %59 = sbr.rel (0) target = $region33
    $region32: #{tpu_custom_call.1} parent=1 // pred_region
      %60 = dma.done [#allocation4], 64
    $region33: #{tpu_custom_call.1} parent=1 // pred_fallthru
      _
    // Predicated region
    $region34: #{tpu_custom_call.1} parent=1 // pred_check
      _
    $region35: #{tpu_custom_call.1} parent=1 // pred_check_branch
      %62 = sbr.rel (0) target = $region37
    $region36: #{tpu_custom_call.1} parent=1 // pred_region
      %63 = dma.done [#allocation6], 256
    $region37: #{tpu_custom_call.1} parent=1 // pred_fallthru
      _
    // Predicated region
    $region38: #{tpu_custom_call.1} parent=1 // pred_check
      _
    $region39: #{tpu_custom_call.1} parent=1 // pred_check_branch
      %65 = sbr.rel (0) target = $region41
    $region40: #{tpu_custom_call.1} parent=1 // pred_region
      %66 = dma.done [#allocation6], 512
    $region41: #{tpu_custom_call.1} parent=1 // pred_fallthru
      _
    %v68 = vld [vmem:[#allocation3] sm:$0xf]
    %v69 = vld [vmem:[#allocation5] sm:$0xf]
    %v70 = vld [vmem:[#allocation5 + $0x4] sm:$0xf]
    %v71 = vld [vmem:[#allocation5 + $0x8] sm:$0xf]
    %v72 = vld [vmem:[#allocation5 + $0xc] sm:$0xf]
    %v73 = vld [vmem:[%s2] sm:$0x1]
    %v75 = vlaneseq
    %v76 = vshrl.u32 %v75, 7
    %v77 = vsub.s32 0, %v76
    %v78 = vrot.slane %v73, %v77
    %v84 = vunpack.c.l.b16 %v69
    %v85 = vunpack.c.l.b16 %v70
    %v86 = vunpack.c.l.b16 %v71
    %v87 = vunpack.c.l.b16 %v72
    %v88 = vpack.c.b16 %v85, %v84
    %v89 = vpack.c.b16 %v87, %v86
    %vm92 = vcmask 261120
    %v94 = vsel %vm92, %v68, 0
    %96 = vmatprep.subr.bf16.mxu0 0
    %97 = vmatpush1.bf16.msra.mxu0 %v88
    %98 = vmatprep.subr.bf16.mxu0 0
    %99 = vmatpush1.bf16.msra.mxu0 %v89
    %100 = vmatprep.subr.bf16.mxu0 0
    %101 = vmatpush1.bf16.msra.mxu0 0
    %102 = vmatprep.subr.bf16.mxu0 0
    %103 = vmatpush1.bf16.msra.mxu0 0
    %104 = vmatprep.subr.bf16.mxu0 0
    %105 = vmatpush1.bf16.msra.mxu0 0
    %106 = vmatprep.subr.bf16.mxu0 0
    %107 = vmatpush1.bf16.msra.mxu0 0
    %108 = vmatprep.subr.bf16.mxu0 0
    %109 = vmatpush1.bf16.msra.mxu0 0
    %110 = vmatprep.subr.bf16.mxu0 0
    %111 = vmatpush1.bf16.msra.mxu0 0
    %112 = vmatprep.subr.bf16.mxu0 0
    %113 = vmatpush1.bf16.msra.mxu0 0
    %114 = vmatprep.subr.bf16.mxu0 0
    %115 = vmatpush1.bf16.msra.mxu0 0
    %116 = vmatprep.subr.bf16.mxu0 0
    %117 = vmatpush1.bf16.msra.mxu0 0
    %118 = vmatprep.subr.bf16.mxu0 0
    %119 = vmatpush1.bf16.msra.mxu0 0
    %120 = vmatprep.subr.bf16.mxu0 0
    %121 = vmatpush1.bf16.msra.mxu0 0
    %122 = vmatprep.subr.bf16.mxu0 0
    %123 = vmatpush1.bf16.msra.mxu0 0
    %124 = vmatprep.subr.bf16.mxu0 0
    %125 = vmatpush1.bf16.msra.mxu0 0
    %126 = vmatprep.subr.bf16.mxu0 0
    %127 = vmatpush1.bf16.msra.mxu0 0
    %128 = vmatprep.mubr.bf16.mxu0 0
    %129 = vmatmul.mubr.bf16.gmra.mrb[0].mxu0 %v94
    %v130 = vpop.f32.mrb[0].mxu0
    %v131 = vadd.f32 %v78, %v130
    %v132 = vpop.f32.mrb[0].mxu0
    %v133 = vpop.f32.mrb[0].mxu0
    %v134 = vpop.f32.mrb[0].mxu0
    %135 = vdwg.mxu0
    %v136 = vmax.f32 %v131, 0.0
    %v137 = vpack.c.bf16 %v136, %v136
    %v138 = vld [vmem:[#allocation7] sm:$0xf]
    %v139 = vld [vmem:[#allocation7 + $0x4] sm:$0xf]
    %v140 = vld [vmem:[#allocation7 + $0x8] sm:$0xf]
    %v141 = vld [vmem:[#allocation7 + $0xc] sm:$0xf]
    %v142 = vld [vmem:[#allocation7 + $0x10] sm:$0xf]
    %v143 = vld [vmem:[#allocation7 + $0x14] sm:$0xf]
    %v144 = vld [vmem:[#allocation7 + $0x18] sm:$0xf]
    %v145 = vld [vmem:[#allocation7 + $0x1c] sm:$0xf]
    %v146 = vld [vmem:[%s4] sm:$0x1]
    %v148 = vlaneseq
    %v149 = vshrl.u32 %v148, 7
    %v150 = vsub.s32 0, %v149
    %v151 = vrot.slane %v146, %v150
    %v161 = vunpack.c.l.b16 %v138
    %v162 = vunpack.c.l.b16 %v139
    %v163 = vunpack.c.l.b16 %v140
    %v164 = vunpack.c.l.b16 %v141
    %v165 = vunpack.c.l.b16 %v142
    %v166 = vunpack.c.l.b16 %v143
    %v167 = vunpack.c.l.b16 %v144
    %v168 = vunpack.c.l.b16 %v145
    %v169 = vpack.c.b16 %v162, %v161
    %v170 = vpack.c.b16 %v164, %v163
    %v171 = vpack.c.b16 %v166, %v165
    %v172 = vpack.c.b16 %v168, %v167
    %vm177 = vcmask 523264
    %v179 = vsel %vm177, %v137, 0
    %181 = vmatprep.subr.bf16.mxu0 0
    %182 = vmatpush1.bf16.msra.mxu0 %v169
    %183 = vmatprep.subr.bf16.mxu0 0
    %184 = vmatpush1.bf16.msra.mxu0 %v170
    %185 = vmatprep.subr.bf16.mxu0 0
    %186 = vmatpush1.bf16.msra.mxu0 %v171
    %187 = vmatprep.subr.bf16.mxu0 0
    %188 = vmatpush1.bf16.msra.mxu0 %v172
    %189 = vmatprep.subr.bf16.mxu0 0
    %190 = vmatpush1.bf16.msra.mxu0 0
    %191 = vmatprep.subr.bf16.mxu0 0
    %192 = vmatpush1.bf16.msra.mxu0 0
    %193 = vmatprep.subr.bf16.mxu0 0
    %194 = vmatpush1.bf16.msra.mxu0 0
    %195 = vmatprep.subr.bf16.mxu0 0
    %196 = vmatpush1.bf16.msra.mxu0 0
    %197 = vmatprep.subr.bf16.mxu0 0
    %198 = vmatpush1.bf16.msra.mxu0 0
    %199 = vmatprep.subr.bf16.mxu0 0
    %200 = vmatpush1.bf16.msra.mxu0 0
    %201 = vmatprep.subr.bf16.mxu0 0
    %202 = vmatpush1.bf16.msra.mxu0 0
    %203 = vmatprep.subr.bf16.mxu0 0
    %204 = vmatpush1.bf16.msra.mxu0 0
    %205 = vmatprep.subr.bf16.mxu0 0
    %206 = vmatpush1.bf16.msra.mxu0 0
    %207 = vmatprep.subr.bf16.mxu0 0
    %208 = vmatpush1.bf16.msra.mxu0 0
    %209 = vmatprep.subr.bf16.mxu0 0
    %210 = vmatpush1.bf16.msra.mxu0 0
    %211 = vmatprep.subr.bf16.mxu0 0
    %212 = vmatpush1.bf16.msra.mxu0 0
    %213 = vmatprep.mubr.bf16.mxu0 0
    %214 = vmatmul.mubr.bf16.gmra.mrb[0].mxu0 %v179
    %v215 = vpop.f32.mrb[0].mxu0
    %v216 = vadd.f32 %v151, %v215
    %v217 = vpop.f32.mrb[0].mxu0
    %v218 = vpop.f32.mrb[0].mxu0
    %v219 = vpop.f32.mrb[0].mxu0
    %220 = vdwg.mxu0
    %v221 = vmax.f32 %v216, 0.0
    %v222 = vld [vmem:[%s5] sm:$0x1]
    %v224 = vlaneseq
    %v225 = vshrl.u32 %v224, 7
    %v226 = vsub.s32 0, %v225
    %v227 = vrot.slane %v222, %v226
    %v229 = vmul.f32 %v221, %v227
    %v230 = vsel %vm177, %v229, 0.0
    %231 = vadd.xlane.f32.xlu0 %v230
    %v232 = vpop.xlane.xlu0 %231
    %v233 = vld [vmem:[#allocation2] sm:$0x1]
    %v235 = vlaneseq
    %v236 = vshrl.u32 %v235, 7
    %v237 = vsub.s32 0, %v236
    %v238 = vrot.slane %v233, %v237
    %v240 = vadd.f32 %v232, %v238
    %vm241 = vcmask 7168
    %242 = vst.msk [vmem:[%s7] sm:$0xff] %vm241, %v240
    // Predicated region
    $region42: #{tpu_custom_call.1} parent=1 // pred_check
      _
    $region43: #{tpu_custom_call.1} parent=1 // pred_check_branch
      %244 = sbr.rel (0) target = $region45
    $region44: #{tpu_custom_call.1} parent=1 // pred_region
      _
    $region45: #{tpu_custom_call.1} parent=1 // pred_fallthru
      _
    // Predicated region
    $region46: #{tpu_custom_call.1} parent=1 // pred_check
      _
    $region47: #{tpu_custom_call.1} parent=1 // pred_check_branch
      %246 = sbr.rel (0) target = $region49
    $region48: #{tpu_custom_call.1} parent=1 // pred_region
      _
    $region49: #{tpu_custom_call.1} parent=1 // pred_fallthru
      _
    %247 = vsyncpa [#allocation4], 1
    %248 = vsyncpa [#allocation6], 1

</llo_original>
